<compile_context>
chip_gen: v7x
topology: tpu7x:2x2x1
jax: 0.10.0
libtpu: 0.0.40
codegen_flags: <defaults>
</compile_context>

<pallas_src>
import functools

import jax
import jax.numpy as jnp
from jax import lax
from jax.experimental import pallas as pl
from jax.experimental.pallas import tpu as pltpu


def _round_up(x, m):
    return (x + m - 1) // m * m


def critic_kernel(s_ref, a_ref, w1s_ref, w1a_ref, b1_ref, w2_ref, b2_ref,
                  wq_ref, bq_ref, q_ref):
    """One (tb, s_dim)+(tb, a_dim) batch tile -> one (1, 1, tb) q row tile."""
    # Cast activations to bf16 in-kernel (VPU slot; inputs stay f32 in HBM).
    s = s_ref[...].astype(jnp.bfloat16)                    # (tb, s_dim)
    a = a_ref[...].astype(jnp.bfloat16)                    # (tb, a_dim)

    # fc1 as two K-split MXU dots (concat-free), f32 accumulate; bias+ReLU f32.
    h1 = jnp.dot(s, w1s_ref[...], preferred_element_type=jnp.float32)
    h1 = h1 + jnp.dot(a, w1a_ref[...], preferred_element_type=jnp.float32)
    h1 = jnp.maximum(h1 + b1_ref[...], 0.0)                # (tb, fc1p)

    # fc2: bf16 MXU operands, f32 accumulate.
    h2 = jnp.dot(h1.astype(jnp.bfloat16), w2_ref[...],
                 preferred_element_type=jnp.float32) + b2_ref[...]
    h2 = jnp.maximum(h2, 0.0)                              # (tb, fc2p)

    # q head: wq(8, fc2p) x h2(tb, fc2p)^T -> (8, tb); row 0 is the real head
    # (rows 1..7 are zero padding).  Result is lane-dense along the batch.
    q_rows = lax.dot_general(
        wq_ref[...], h2.astype(jnp.bfloat16),
        dimension_numbers=(((1,), (1,)), ((), ())),
        preferred_element_type=jnp.float32)                # (8, tb)
    q_ref[0] = q_rows[0:1, :] + bq_ref[...]                # (1, tb)


def init_critic_params(key, input_dims, fc1_dims, fc2_dims, n_agents, n_actions):
    """f32 master params mimicking torch.nn.Linear defaults (U[-1/sqrt(fan_in), +])."""
    cat_dims = input_dims + n_agents * n_actions
    k1, k2, k3, k4, k5, k6 = jax.random.split(key, 6)

    def uniform(k, shape, fan_in):
        bound = 1.0 / jnp.sqrt(float(fan_in))
        return jax.random.uniform(k, shape, jnp.float32, -bound, bound)

    # stored as (in, out); biases as (1, out) for clean lane broadcasting
    w1 = uniform(k1, (cat_dims, fc1_dims), cat_dims)
    b1 = uniform(k2, (1, fc1_dims), cat_dims)
    w2 = uniform(k3, (fc1_dims, fc2_dims), fc1_dims)
    b2 = uniform(k4, (1, fc2_dims), fc1_dims)
    wq = uniform(k5, (fc2_dims, 1), fc2_dims)
    bq = uniform(k6, (1, 1), fc2_dims)
    return dict(w1=w1, b1=b1, w2=w2, b2=b2, wq=wq, bq=bq)


def prepare_kernel_params(params, input_dims, lane=128):
    """One-time conversion of f32 master params to the kernel layout/dtypes.

    * w1 split into state/action halves (concat-free fc1).
    * fc1/fc2 zero-padded to a multiple of 128 lanes (unmasked MXU/VPU layouts).
    * wq stored as an (8, fc2p) bf16 block: row 0 = real weights, rows 1..7 zero.
    """
    fc1 = params["w1"].shape[1]
    fc2 = params["w2"].shape[1]
    fc1p = _round_up(fc1, lane)
    fc2p = _round_up(fc2, lane)

    def pad_to(x, shape):
        return jnp.pad(x, [(0, t - s) for s, t in zip(x.shape, shape)])

    w1 = params["w1"]
    a_in = w1.shape[0] - input_dims
    return dict(
        w1_s=pad_to(w1[:input_dims, :], (input_dims, fc1p)).astype(jnp.bfloat16),
        w1_a=pad_to(w1[input_dims:, :], (a_in, fc1p)).astype(jnp.bfloat16),
        b1=pad_to(params["b1"], (1, fc1p)),                       # f32
        w2=pad_to(params["w2"], (fc1p, fc2p)).astype(jnp.bfloat16),
        b2=pad_to(params["b2"], (1, fc2p)),                       # f32
        wq_rows=pad_to(params["wq"].T, (8, fc2p)).astype(jnp.bfloat16),
        bq=params["bq"],                                          # (1, 1) f32
    )


def _choose_block(batch, block_batch):
    """Batch tile: multiple of 16, capped so the grid has >=2 steps (v7x 2 TCs),
    rounded to 128 for lane-dense output rows when the batch is large enough."""
    rb = _round_up(batch, 16)
    if rb <= 32:
        return rb
    half = -(-rb // 2)
    half = _round_up(half, 128 if rb >= 256 else 16)
    return max(16, min(_round_up(block_batch, 16), half))


@functools.partial(jax.jit, static_argnames=("block_batch",))
def critic_forward(state, action, kparams, *, block_batch=1024):
    batch, s_dim = state.shape
    a_dim = action.shape[1]
    fc1p = kparams["w1_s"].shape[1]
    fc2p = kparams["w2"].shape[1]

    tb = _choose_block(batch, block_batch)
    n_tiles = pl.cdiv(batch, tb)

    # Weights/biases: full blocks, same block index every step -> VMEM-resident.
    def resident(shape):
        return pl.BlockSpec(shape, lambda i, _n=len(shape): (0,) * _n)

    flops = 2 * batch * ((s_dim + a_dim) * fc1p + fc1p * fc2p + fc2p)
    bytes_accessed = (
        (state.size + action.size) * 4                      # f32 activations in
        + (kparams["w1_s"].size + kparams["w1_a"].size
           + kparams["w2"].size + kparams["wq_rows"].size) * 2   # bf16 weights
        + (kparams["b1"].size + kparams["b2"].size + kparams["bq"].size) * 4
        + n_tiles * tb * 4)                                  # f32 q out

    q_rows = pl.pallas_call(
        critic_kernel,
        out_shape=jax.ShapeDtypeStruct((n_tiles, 1, tb), jnp.float32),
        grid=(n_tiles,),
        in_specs=[
            pl.BlockSpec((tb, s_dim), lambda i: (i, 0)),     # state: batch-tiled
            pl.BlockSpec((tb, a_dim), lambda i: (i, 0)),     # action: batch-tiled
            resident(kparams["w1_s"].shape),                 # w1 (state half)
            resident(kparams["w1_a"].shape),                 # w1 (action half)
            resident(kparams["b1"].shape),                   # b1
            resident(kparams["w2"].shape),                   # w2
            resident(kparams["b2"].shape),                   # b2
            resident(kparams["wq_rows"].shape),              # wq (row 0 real)
            resident(kparams["bq"].shape),                   # bq
        ],
        out_specs=pl.BlockSpec((1, 1, tb), lambda i: (i, 0, 0)),
        compiler_params=pltpu.CompilerParams(
            # "parallel" lets the runtime shard batch tiles across the 2 TCs on
            # v7x (no-op on single-TC v5e/v6e).
            dimension_semantics=("parallel",)),
        cost_estimate=pl.CostEstimate(
            flops=flops, transcendentals=0, bytes_accessed=bytes_accessed),
    )(state, action, kparams["w1_s"], kparams["w1_a"], kparams["b1"],
      kparams["w2"], kparams["b2"], kparams["wq_rows"], kparams["bq"])

    # (n_tiles, 1, tb) lane-dense rows -> (batch, 1); padded tail is discarded.
    return q_rows.reshape(-1)[:batch][:, None]


def critic_forward_ref_f32(state, action, params):
    """Pure-f32 reference (exact PyTorch-module math)."""
    x = jnp.concatenate([state, action], axis=1)
    h1 = jax.nn.relu(x @ params["w1"] + params["b1"])
    h2 = jax.nn.relu(h1 @ params["w2"] + params["b2"])
    return h2 @ params["wq"] + params["bq"]


def critic_forward_ref_bf16(state, action, params):
    """Reference mirroring the kernel's bf16-operand / f32-accumulate arithmetic."""
    sdim = state.shape[1]
    w1 = params["w1"].astype(jnp.bfloat16)
    w2 = params["w2"].astype(jnp.bfloat16)
    wq = params["wq"].astype(jnp.bfloat16)
    h1 = (jnp.dot(state.astype(jnp.bfloat16), w1[:sdim],
                  preferred_element_type=jnp.float32)
          + jnp.dot(action.astype(jnp.bfloat16), w1[sdim:],
                    preferred_element_type=jnp.float32)
          + params["b1"])
    h1 = jnp.maximum(h1, 0.0)
    h2 = jnp.maximum(
        jnp.dot(h1.astype(jnp.bfloat16), w2,
                preferred_element_type=jnp.float32) + params["b2"], 0.0)
    return (jnp.dot(h2.astype(jnp.bfloat16), wq,
                    preferred_element_type=jnp.float32) + params["bq"])


if __name__ == "__main__":
    # Small, forward-consistent shapes.
    batch = 8
    input_dims = 16      # per-critic joint-state dim
    n_agents = 2
    n_actions = 4        # action input is (batch, n_agents * n_actions)
    fc1_dims = 32
    fc2_dims = 32

    key = jax.random.PRNGKey(0)
    kp, ks, ka, ks2, ka2 = jax.random.split(key, 5)

    params = init_critic_params(kp, input_dims, fc1_dims, fc2_dims, n_agents, n_actions)
    kparams = prepare_kernel_params(params, input_dims)

    state = jax.random.normal(ks, (batch, input_dims), jnp.float32)
    action = jax.random.normal(ka, (batch, n_agents * n_actions), jnp.float32)

    q = jax.block_until_ready(critic_forward(state, action, kparams))
    assert q.shape == (batch, 1)

    q_bf16 = critic_forward_ref_bf16(state, action, params)
    q_f32 = critic_forward_ref_f32(state, action, params)
    assert jnp.allclose(q, q_bf16, atol=1e-3, rtol=1e-3), "mismatch vs bf16-matched reference"
    assert jnp.allclose(q, q_f32, atol=5e-2, rtol=0.0), "mismatch vs f32 reference"

    # Larger ragged batch exercising the multi-step grid, resident weights,
    # grid-edge (partial last tile) handling and the lane-dense output path.
    big = 300
    state2 = jax.random.normal(ks2, (big, input_dims), jnp.float32)
    action2 = jax.random.normal(ka2, (big, n_agents * n_actions), jnp.float32)
    q2 = jax.block_until_ready(critic_forward(state2, action2, kparams, block_batch=128))
    assert q2.shape == (big, 1)
    assert jnp.allclose(q2, critic_forward_ref_bf16(state2, action2, params),
                        atol=1e-3, rtol=1e-3), "grid-path mismatch vs bf16-matched reference"

    # Default (large-tile) path on the same ragged batch.
    q3 = jax.block_until_ready(critic_forward(state2, action2, kparams))
    assert jnp.allclose(q3, q2, atol=1e-5, rtol=1e-5), "tile-size dependence detected"

    print("KERNEL_OK")
</pallas_src>

<mosaic_0001>
module attributes {stable_mosaic.version = 11 : i64} {
  func.func @critic_kernel(%arg0: i32, %arg1: memref<16x16xf32, #tpu.memory_space<vmem>>, %arg2: memref<16x8xf32, #tpu.memory_space<vmem>>, %arg3: memref<16x128xbf16, #tpu.memory_space<vmem>>, %arg4: memref<8x128xbf16, #tpu.memory_space<vmem>>, %arg5: memref<1x128xf32, #tpu.memory_space<vmem>>, %arg6: memref<128x128xbf16, #tpu.memory_space<vmem>>, %arg7: memref<1x128xf32, #tpu.memory_space<vmem>>, %arg8: memref<8x128xbf16, #tpu.memory_space<vmem>>, %arg9: memref<1x1xf32, #tpu.memory_space<vmem>>, %arg10: memref<1x1x16xf32, #tpu.memory_space<vmem>>) attributes {dimension_semantics = [#tpu.dimension_semantics<parallel>], iteration_bounds = array<i64: 1>, scalar_prefetch = 0 : i64, scratch_operands = 0 : i64, tpu.core_type = #tpu.core_type<tc>, window_params = [{transform_indices = @transform_0, window_bounds = array<i64: 16, 16>}, {transform_indices = @transform_1, window_bounds = array<i64: 16, 8>}, {pipeline_mode = #tpu.pipeline_mode<synchronous>, transform_indices = @transform_2, window_bounds = array<i64: 16, 128>}, {pipeline_mode = #tpu.pipeline_mode<synchronous>, transform_indices = @transform_3, window_bounds = array<i64: 8, 128>}, {pipeline_mode = #tpu.pipeline_mode<synchronous>, transform_indices = @transform_4, window_bounds = array<i64: 1, 128>}, {pipeline_mode = #tpu.pipeline_mode<synchronous>, transform_indices = @transform_5, window_bounds = array<i64: 128, 128>}, {pipeline_mode = #tpu.pipeline_mode<synchronous>, transform_indices = @transform_6, window_bounds = array<i64: 1, 128>}, {pipeline_mode = #tpu.pipeline_mode<synchronous>, transform_indices = @transform_7, window_bounds = array<i64: 8, 128>}, {pipeline_mode = #tpu.pipeline_mode<synchronous>, transform_indices = @transform_8, window_bounds = array<i64: 1, 1>}, {transform_indices = @transform_9, window_bounds = array<i64: 1, 1, 16>}]} {
    %c0 = arith.constant 0 : index
    %c0_0 = arith.constant 0 : index
    %0 = vector.load %arg1[%c0, %c0_0] : memref<16x16xf32, #tpu.memory_space<vmem>>, vector<16x16xf32>
    %1 = arith.truncf %0 : vector<16x16xf32> to vector<16x16xbf16>
    %c0_1 = arith.constant 0 : index
    %c0_2 = arith.constant 0 : index
    %2 = vector.load %arg2[%c0_1, %c0_2] : memref<16x8xf32, #tpu.memory_space<vmem>>, vector<16x8xf32>
    %3 = arith.truncf %2 : vector<16x8xf32> to vector<16x8xbf16>
    %c0_3 = arith.constant 0 : index
    %c0_4 = arith.constant 0 : index
    %4 = vector.load %arg3[%c0_3, %c0_4] : memref<16x128xbf16, #tpu.memory_space<vmem>>, vector<16x128xbf16>
    %cst = arith.constant dense<0.000000e+00> : vector<16x128xf32>
    %5 = tpu.matmul %1, %4, %cst {dimension_numbers = #tpu.dot_dimension_numbers<[1], [0], [0], [1], [0, 0, 1, 1], [], []>} : vector<16x16xbf16>, vector<16x128xbf16>, vector<16x128xf32> -> vector<16x128xf32>
    %c0_5 = arith.constant 0 : index
    %c0_6 = arith.constant 0 : index
    %6 = vector.load %arg4[%c0_5, %c0_6] : memref<8x128xbf16, #tpu.memory_space<vmem>>, vector<8x128xbf16>
    %cst_7 = arith.constant dense<0.000000e+00> : vector<16x128xf32>
    %7 = tpu.matmul %3, %6, %cst_7 {dimension_numbers = #tpu.dot_dimension_numbers<[1], [0], [0], [1], [0, 0, 1, 1], [], []>} : vector<16x8xbf16>, vector<8x128xbf16>, vector<16x128xf32> -> vector<16x128xf32>
    %8 = arith.addf %5, %7 : vector<16x128xf32>
    %c0_8 = arith.constant 0 : index
    %c0_9 = arith.constant 0 : index
    %9 = vector.load %arg5[%c0_8, %c0_9] : memref<1x128xf32, #tpu.memory_space<vmem>>, vector<1x128xf32>
    %10 = vector.broadcast %9 : vector<1x128xf32> to vector<16x128xf32>
    %11 = arith.addf %8, %10 : vector<16x128xf32>
    %cst_10 = arith.constant 0.000000e+00 : f32
    %12 = vector.broadcast %cst_10 : f32 to vector<16x128xf32>
    %13 = arith.maximumf %11, %12 : vector<16x128xf32>
    %14 = arith.truncf %13 : vector<16x128xf32> to vector<16x128xbf16>
    %c0_11 = arith.constant 0 : index
    %c0_12 = arith.constant 0 : index
    %15 = vector.load %arg6[%c0_11, %c0_12] : memref<128x128xbf16, #tpu.memory_space<vmem>>, vector<128x128xbf16>
    %cst_13 = arith.constant dense<0.000000e+00> : vector<16x128xf32>
    %16 = tpu.matmul %14, %15, %cst_13 {dimension_numbers = #tpu.dot_dimension_numbers<[1], [0], [0], [1], [0, 0, 1, 1], [], []>} : vector<16x128xbf16>, vector<128x128xbf16>, vector<16x128xf32> -> vector<16x128xf32>
    %c0_14 = arith.constant 0 : index
    %c0_15 = arith.constant 0 : index
    %17 = vector.load %arg7[%c0_14, %c0_15] : memref<1x128xf32, #tpu.memory_space<vmem>>, vector<1x128xf32>
    %18 = vector.broadcast %17 : vector<1x128xf32> to vector<16x128xf32>
    %19 = arith.addf %16, %18 : vector<16x128xf32>
    %cst_16 = arith.constant 0.000000e+00 : f32
    %20 = vector.broadcast %cst_16 : f32 to vector<16x128xf32>
    %21 = arith.maximumf %19, %20 : vector<16x128xf32>
    %c0_17 = arith.constant 0 : index
    %c0_18 = arith.constant 0 : index
    %22 = vector.load %arg8[%c0_17, %c0_18] : memref<8x128xbf16, #tpu.memory_space<vmem>>, vector<8x128xbf16>
    %23 = arith.truncf %21 : vector<16x128xf32> to vector<16x128xbf16>
    %cst_19 = arith.constant dense<0.000000e+00> : vector<8x16xf32>
    %24 = tpu.matmul %22, %23, %cst_19 {dimension_numbers = #tpu.dot_dimension_numbers<[1], [1], [0], [0], [0, 0, 1, 0], [], []>} : vector<8x128xbf16>, vector<16x128xbf16>, vector<8x16xf32> -> vector<8x16xf32>
    %25 = vector.extract_strided_slice %24 {offsets = [0, 0], sizes = [1, 16], strides = [1, 1]} : vector<8x16xf32> to vector<1x16xf32>
    %c0_20 = arith.constant 0 : index
    %c0_21 = arith.constant 0 : index
    %26 = vector.load %arg9[%c0_20, %c0_21] : memref<1x1xf32, #tpu.memory_space<vmem>>, vector<1x1xf32>
    %27 = vector.broadcast %26 : vector<1x1xf32> to vector<1x16xf32>
    %28 = arith.addf %25, %27 : vector<1x16xf32>
    %c0_22 = arith.constant 0 : index
    %c0_23 = arith.constant 0 : index
    %c0_24 = arith.constant 0 : index
    %29 = vector.load %arg10[%c0_22, %c0_23, %c0_24] : memref<1x1x16xf32, #tpu.memory_space<vmem>>, vector<1x1x16xf32>
    %30 = vector.shape_cast %29 : vector<1x1x16xf32> to vector<1x16xf32>
    %31 = vector.shape_cast %28 : vector<1x16xf32> to vector<1x1x16xf32>
    tpu.vector_store %arg10[%c0_22, %c0_23, %c0_24], %31 {strides = array<i32>} : memref<1x1x16xf32, #tpu.memory_space<vmem>>, vector<1x1x16xf32>,
    return
  }
  func.func @transform_0(%arg0: i32) -> (i32, i32) {
    %c0_i32 = arith.constant 0 : i32
    %c0_i32_0 = arith.constant 0 : i32
    return %arg0, %c0_i32 : i32, i32
  }
  func.func @transform_1(%arg0: i32) -> (i32, i32) {
    %c0_i32 = arith.constant 0 : i32
    %c0_i32_0 = arith.constant 0 : i32
    return %arg0, %c0_i32 : i32, i32
  }
  func.func @transform_2(%arg0: i32) -> (i32, i32) {
    %c0_i32 = arith.constant 0 : i32
    %c0_i32_0 = arith.constant 0 : i32
    %c0_i32_1 = arith.constant 0 : i32
    return %c0_i32, %c0_i32_0 : i32, i32
  }
  func.func @transform_3(%arg0: i32) -> (i32, i32) {
    %c0_i32 = arith.constant 0 : i32
    %c0_i32_0 = arith.constant 0 : i32
    %c0_i32_1 = arith.constant 0 : i32
    return %c0_i32, %c0_i32_0 : i32, i32
  }
  func.func @transform_4(%arg0: i32) -> (i32, i32) {
    %c0_i32 = arith.constant 0 : i32
    %c0_i32_0 = arith.constant 0 : i32
    %c0_i32_1 = arith.constant 0 : i32
    return %c0_i32, %c0_i32_0 : i32, i32
  }
  func.func @transform_5(%arg0: i32) -> (i32, i32) {
    %c0_i32 = arith.constant 0 : i32
    %c0_i32_0 = arith.constant 0 : i32
    %c0_i32_1 = arith.constant 0 : i32
    return %c0_i32, %c0_i32_0 : i32, i32
  }
  func.func @transform_6(%arg0: i32) -> (i32, i32) {
    %c0_i32 = arith.constant 0 : i32
    %c0_i32_0 = arith.constant 0 : i32
    %c0_i32_1 = arith.constant 0 : i32
    return %c0_i32, %c0_i32_0 : i32, i32
  }
  func.func @transform_7(%arg0: i32) -> (i32, i32) {
    %c0_i32 = arith.constant 0 : i32
    %c0_i32_0 = arith.constant 0 : i32
    %c0_i32_1 = arith.constant 0 : i32
    return %c0_i32, %c0_i32_0 : i32, i32
  }
  func.func @transform_8(%arg0: i32) -> (i32, i32) {
    %c0_i32 = arith.constant 0 : i32
    %c0_i32_0 = arith.constant 0 : i32
    %c0_i32_1 = arith.constant 0 : i32
    return %c0_i32, %c0_i32_0 : i32, i32
  }
  func.func @transform_9(%arg0: i32) -> (i32, i32, i32) {
    %c0_i32 = arith.constant 0 : i32
    %c0_i32_0 = arith.constant 0 : i32
    %c0_i32_1 = arith.constant 0 : i32
    return %arg0, %c0_i32, %c0_i32_0 : i32, i32, i32
  }
}

</mosaic_0001>

<llo_original>
// kernel: critic_forward.1
$region0: #{critic_forward.1}
  #allocation0 [shape = 'u32[]', space=smem, size = 0x4, offset = 0x4, fixed_abs, tag = 'smem constant byte address 0x4 - core index']
  #allocation1 [shape = 'u32[144,128]{1,0:T(1,128)}', space=vmem, size = 0x12000, scoped, tag = 'internal scratch']
  #allocation2 [shape = 'f32[1,1]{1,0:T(1,128)S(1)}', space=vmem, size = 0x200, scoped, tag = 'scoped memory for critic_forward.1']
  %s0 = inlined_call_operand.hbm [shape: f32[8,16], index: 0, kind: input, shape index: {}]
  %s1 = inlined_call_operand.hbm [shape: f32[8,8], index: 1, kind: input, shape index: {}]
  %s2 = inlined_call_operand.vmem [shape: bf16[16,128], index: 2, kind: input, shape index: {}]
  %s3 = inlined_call_operand.vmem [shape: bf16[8,128], index: 3, kind: input, shape index: {}]
  %s4 = inlined_call_operand.vmem [shape: f32[1,128], index: 4, kind: input, shape index: {}]
  %s5 = inlined_call_operand.hbm [shape: bf16[128,128], index: 5, kind: input, shape index: {}]
  %s6 = inlined_call_operand.vmem [shape: f32[1,128], index: 6, kind: input, shape index: {}]
  %s7 = inlined_call_operand.vmem [shape: bf16[8,128], index: 7, kind: input, shape index: {}]
  %s8 = inlined_call_operand.<no memory space> [shape: f32[1,1], index: 8, kind: input, shape index: {}]
  %s9 = inlined_call_operand.vmem [shape: f32[1,1,16], index: 9, kind: output, shape index: {}]
  %s10 = sld [smem:[#allocation0]]
  $region58: #{critic_forward.1} parent=0
    _
  %s12 = ssub.s32 1, %s10
  %s13 = scalar_select 0, %s12, %s10
  %v14 = vstv %s8
  %15 = vst [vmem:[#allocation2] sm:$0x1] %v14
  $region1: #{critic_forward.1} parent=0
    #allocation3 [shape = 'u8[8192]{0}', space=vmem, size = 0x2000, scoped, tag = 'input window, operand 0, single buffered']
    #allocation4 [shape = 's32[1]{0}', space=sflag, size = 0x4, scoped, tag = 'scoped memory for critic_forward.1']
    #allocation5 [shape = 'u8[8192]{0}', space=vmem, size = 0x2000, scoped, tag = 'input window, operand 1, single buffered']
    #allocation6 [shape = 's32[1]{0}', space=sflag, size = 0x4, scoped, tag = 'scoped memory for critic_forward.1']
    #allocation7 [shape = 'u8[32768]{0}', space=vmem, size = 0x8000, scoped, tag = 'input window, operand 5, single buffered']
    %16 = vsyncpa [#allocation4], 0
    %17 = vsyncpa [#allocation6], 0
    // Predicated region
    $region2: #{critic_forward.1} parent=1 // pred_check
      _
    $region3: #{critic_forward.1} parent=1 // pred_check_branch
      %19 = sbr.rel (0) target = $region5
    $region4: #{critic_forward.1} parent=1 // pred_region
      %s21 = ssub.s32 256, 128
      %22 = vsyncadd [#allocation4], %s21
      %s23 = sshll.u32 [#allocation3], 4
      %s24 = int_to_ptr.vmem [resolvable:$true] %s23
      %29 = dma.hbm_to_vmem [thread:$0]  %s0, 128, %s24, [#allocation4], 128, 128, 8
    $region5: #{critic_forward.1} parent=1 // pred_fallthru
      _
    // Predicated region
    $region6: #{critic_forward.1} parent=1 // pred_check
      _
    $region7: #{critic_forward.1} parent=1 // pred_check_branch
      %31 = sbr.rel (0) target = $region9
    $region8: #{critic_forward.1} parent=1 // pred_region
      %s33 = ssub.s32 256, 128
      %34 = vsyncadd [#allocation6], %s33
      %s35 = sshll.u32 [#allocation5], 4
      %s36 = int_to_ptr.vmem [resolvable:$true] %s35
      %41 = dma.hbm_to_vmem [thread:$0]  %s1, 128, %s36, [#allocation6], 128, 128, 8
    $region9: #{critic_forward.1} parent=1 // pred_fallthru
      _
    // Predicated region
    $region10: #{critic_forward.1} parent=1 // pred_check
      _
    $region11: #{critic_forward.1} parent=1 // pred_check_branch
      %43 = sbr.rel (0) target = $region13
    $region12: #{critic_forward.1} parent=1 // pred_region
      _
    $region13: #{critic_forward.1} parent=1 // pred_fallthru
      _
    // Predicated region
    $region14: #{critic_forward.1} parent=1 // pred_check
      _
    $region15: #{critic_forward.1} parent=1 // pred_check_branch
      %45 = sbr.rel (0) target = $region17
    $region16: #{critic_forward.1} parent=1 // pred_region
      _
    $region17: #{critic_forward.1} parent=1 // pred_fallthru
      _
    // Predicated region
    $region18: #{critic_forward.1} parent=1 // pred_check
      _
    $region19: #{critic_forward.1} parent=1 // pred_check_branch
      %47 = sbr.rel (0) target = $region21
    $region20: #{critic_forward.1} parent=1 // pred_region
      _
    $region21: #{critic_forward.1} parent=1 // pred_fallthru
      _
    // Predicated region
    $region22: #{critic_forward.1} parent=1 // pred_check
      _
    $region23: #{critic_forward.1} parent=1 // pred_check_branch
      %49 = sbr.rel (0) target = $region25
    $region24: #{critic_forward.1} parent=1 // pred_region
      %s51 = ssub.s32 1024, 1024
      %52 = vsyncadd [#allocation6], %s51
      %s53 = sshll.u32 [#allocation7], 4
      %s54 = int_to_ptr.vmem [resolvable:$true] %s53
      %59 = dma.hbm_to_vmem [thread:$0]  %s5, 1024, %s54, [#allocation6], 64, 64, 4
    $region25: #{critic_forward.1} parent=1 // pred_fallthru
      _
    // Predicated region
    $region26: #{critic_forward.1} parent=1 // pred_check
      _
    $region27: #{critic_forward.1} parent=1 // pred_check_branch
      %61 = sbr.rel (0) target = $region29
    $region28: #{critic_forward.1} parent=1 // pred_region
      _
    $region29: #{critic_forward.1} parent=1 // pred_fallthru
      _
    // Predicated region
    $region30: #{critic_forward.1} parent=1 // pred_check
      _
    $region31: #{critic_forward.1} parent=1 // pred_check_branch
      %63 = sbr.rel (0) target = $region33
    $region32: #{critic_forward.1} parent=1 // pred_region
      _
    $region33: #{critic_forward.1} parent=1 // pred_fallthru
      _
    // Predicated region
    $region34: #{critic_forward.1} parent=1 // pred_check
      _
    $region35: #{critic_forward.1} parent=1 // pred_check_branch
      %65 = sbr.rel (0) target = $region37
    $region36: #{critic_forward.1} parent=1 // pred_region
      _
    $region37: #{critic_forward.1} parent=1 // pred_fallthru
      _
    // Predicated region
    $region38: #{critic_forward.1} parent=1 // pred_check
      _
    $region39: #{critic_forward.1} parent=1 // pred_check_branch
      %67 = sbr.rel (0) target = $region41
    $region40: #{critic_forward.1} parent=1 // pred_region
      %68 = dma.done [#allocation4], 256
    $region41: #{critic_forward.1} parent=1 // pred_fallthru
      _
    // Predicated region
    $region42: #{critic_forward.1} parent=1 // pred_check
      _
    $region43: #{critic_forward.1} parent=1 // pred_check_branch
      %70 = sbr.rel (0) target = $region45
    $region44: #{critic_forward.1} parent=1 // pred_region
      %71 = dma.done [#allocation6], 256
    $region45: #{critic_forward.1} parent=1 // pred_fallthru
      _
    // Predicated region
    $region46: #{critic_forward.1} parent=1 // pred_check
      _
    $region47: #{critic_forward.1} parent=1 // pred_check_branch
      %73 = sbr.rel (0) target = $region49
    $region48: #{critic_forward.1} parent=1 // pred_region
      %74 = dma.done [#allocation6], 1024
    $region49: #{critic_forward.1} parent=1 // pred_fallthru
      _
    %v76 = vld [vmem:[#allocation3] sm:$0xff]
    %v77 = vld [vmem:[#allocation3 + $0x8] sm:$0xff]
    %v78 = vpack.c.bf16 %v77, %v76
    %v79 = vld [vmem:[#allocation5] sm:$0xff]
    %v80 = vld [vmem:[#allocation5 + $0x8] sm:$0xff]
    %v81 = vpack.c.bf16 %v80, %v79
    %v82 = vld [vmem:[%s2] sm:$0xf]
    %v83 = vld [vmem:[%s2 + $0x4] sm:$0xf]
    %v84 = vld [vmem:[%s3] sm:$0xf]
    %vm85 = vcmask 64512
    %v87 = vsel %vm85, %v81, 0
    %vm89 = vcmask 1043456
    %v91 = vsel %vm89, %v84, 0
    %93 = vmatprep.subr.bf16.mxu0 0
    %94 = vmatpush1.bf16.msra.mxu0 %v91
    %95 = vmatprep.subr.bf16.mxu0 0
    %96 = vmatpush1.bf16.msra.mxu0 0
    %97 = vmatprep.subr.bf16.mxu0 0
    %98 = vmatpush1.bf16.msra.mxu0 0
    %99 = vmatprep.subr.bf16.mxu0 0
    %100 = vmatpush1.bf16.msra.mxu0 0
    %101 = vmatprep.subr.bf16.mxu0 0
    %102 = vmatpush1.bf16.msra.mxu0 0
    %103 = vmatprep.subr.bf16.mxu0 0
    %104 = vmatpush1.bf16.msra.mxu0 0
    %105 = vmatprep.subr.bf16.mxu0 0
    %106 = vmatpush1.bf16.msra.mxu0 0
    %107 = vmatprep.subr.bf16.mxu0 0
    %108 = vmatpush1.bf16.msra.mxu0 0
    %109 = vmatprep.subr.bf16.mxu0 0
    %110 = vmatpush1.bf16.msra.mxu0 0
    %111 = vmatprep.subr.bf16.mxu0 0
    %112 = vmatpush1.bf16.msra.mxu0 0
    %113 = vmatprep.subr.bf16.mxu0 0
    %114 = vmatpush1.bf16.msra.mxu0 0
    %115 = vmatprep.subr.bf16.mxu0 0
    %116 = vmatpush1.bf16.msra.mxu0 0
    %117 = vmatprep.subr.bf16.mxu0 0
    %118 = vmatpush1.bf16.msra.mxu0 0
    %119 = vmatprep.subr.bf16.mxu0 0
    %120 = vmatpush1.bf16.msra.mxu0 0
    %121 = vmatprep.subr.bf16.mxu0 0
    %122 = vmatpush1.bf16.msra.mxu0 0
    %123 = vmatprep.subr.bf16.mxu0 0
    %124 = vmatpush1.bf16.msra.mxu0 0
    %125 = vmatprep.mubr.bf16.mxu0 0
    %126 = vmatmul.mubr.bf16.gmra.mrb[0].mxu0 %v87
    %v127 = vpop.f32.mrb[0].mxu0
    %v128 = vadd.f32 0.0, %v127
    %v129 = vpop.f32.mrb[0].mxu0
    %v130 = vpop.f32.mrb[0].mxu0
    %v131 = vadd.f32 0.0, %v130
    %v132 = vpop.f32.mrb[0].mxu0
    %133 = vdwg.mxu0
    %v136 = vunpack.c.l.b16 %v82
    %v137 = vunpack.c.l.b16 %v83
    %v138 = vpack.c.b16 %v137, %v136
    %vm140 = vcmask 130048
    %v142 = vsel %vm140, %v78, 0
    %144 = vmatprep.subr.bf16.mxu0 0
    %145 = vmatpush1.bf16.msra.mxu0 %v138
    %146 = vmatprep.subr.bf16.mxu0 0
    %147 = vmatpush1.bf16.msra.mxu0 0
    %148 = vmatprep.subr.bf16.mxu0 0
    %149 = vmatpush1.bf16.msra.mxu0 0
    %150 = vmatprep.subr.bf16.mxu0 0
    %151 = vmatpush1.bf16.msra.mxu0 0
    %152 = vmatprep.subr.bf16.mxu0 0
    %153 = vmatpush1.bf16.msra.mxu0 0
    %154 = vmatprep.subr.bf16.mxu0 0
    %155 = vmatpush1.bf16.msra.mxu0 0
    %156 = vmatprep.subr.bf16.mxu0 0
    %157 = vmatpush1.bf16.msra.mxu0 0
    %158 = vmatprep.subr.bf16.mxu0 0
    %159 = vmatpush1.bf16.msra.mxu0 0
    %160 = vmatprep.subr.bf16.mxu0 0
    %161 = vmatpush1.bf16.msra.mxu0 0
    %162 = vmatprep.subr.bf16.mxu0 0
    %163 = vmatpush1.bf16.msra.mxu0 0
    %164 = vmatprep.subr.bf16.mxu0 0
    %165 = vmatpush1.bf16.msra.mxu0 0
    %166 = vmatprep.subr.bf16.mxu0 0
    %167 = vmatpush1.bf16.msra.mxu0 0
    %168 = vmatprep.subr.bf16.mxu0 0
    %169 = vmatpush1.bf16.msra.mxu0 0
    %170 = vmatprep.subr.bf16.mxu0 0
    %171 = vmatpush1.bf16.msra.mxu0 0
    %172 = vmatprep.subr.bf16.mxu0 0
    %173 = vmatpush1.bf16.msra.mxu0 0
    %174 = vmatprep.subr.bf16.mxu0 0
    %175 = vmatpush1.bf16.msra.mxu0 0
    %176 = vmatprep.mubr.bf16.mxu0 0
    %177 = vmatmul.mubr.bf16.gmra.mrb[0].mxu0 %v142
    %v178 = vpop.f32.mrb[0].mxu0
    %v179 = vadd.f32 %v128, %v178
    %v180 = vpop.f32.mrb[0].mxu0
    %v181 = vpop.f32.mrb[0].mxu0
    %v182 = vadd.f32 %v131, %v181
    %v183 = vpop.f32.mrb[0].mxu0
    %184 = vdwg.mxu0
    %v185 = vld [vmem:[%s4] sm:$0x1]
    %v187 = vlaneseq
    %v188 = vshrl.u32 %v187, 7
    %v189 = vsub.s32 0, %v188
    %v190 = vrot.slane %v185, %v189
    %v192 = vadd.f32 %v179, %v190
    %v193 = vadd.f32 %v182, %v190
    %v194 = vmax.f32 %v192, 0.0
    %v195 = vmax.f32 %v193, 0.0
    %v196 = vpack.c.bf16 %v195, %v194
    %v197 = vld [vmem:[#allocation7] sm:$0xf]
    %v198 = vld [vmem:[#allocation7 + $0x4] sm:$0xf]
    %v199 = vld [vmem:[#allocation7 + $0x8] sm:$0xf]
    %v200 = vld [vmem:[#allocation7 + $0xc] sm:$0xf]
    %v201 = vld [vmem:[#allocation7 + $0x10] sm:$0xf]
    %v202 = vld [vmem:[#allocation7 + $0x14] sm:$0xf]
    %v203 = vld [vmem:[#allocation7 + $0x18] sm:$0xf]
    %v204 = vld [vmem:[#allocation7 + $0x1c] sm:$0xf]
    %v205 = vld [vmem:[#allocation7 + $0x20] sm:$0xf]
    %v206 = vld [vmem:[#allocation7 + $0x24] sm:$0xf]
    %v207 = vld [vmem:[#allocation7 + $0x28] sm:$0xf]
    %v208 = vld [vmem:[#allocation7 + $0x2c] sm:$0xf]
    %v209 = vld [vmem:[#allocation7 + $0x30] sm:$0xf]
    %v210 = vld [vmem:[#allocation7 + $0x34] sm:$0xf]
    %v211 = vld [vmem:[#allocation7 + $0x38] sm:$0xf]
    %v212 = vld [vmem:[#allocation7 + $0x3c] sm:$0xf]
    %v213 = vld [vmem:[%s6] sm:$0x1]
    %v215 = vlaneseq
    %v216 = vshrl.u32 %v215, 7
    %v217 = vsub.s32 0, %v216
    %v218 = vrot.slane %v213, %v217
    %v236 = vunpack.c.l.b16 %v197
    %v237 = vunpack.c.l.b16 %v198
    %v238 = vunpack.c.l.b16 %v199
    %v239 = vunpack.c.l.b16 %v200
    %v240 = vunpack.c.l.b16 %v201
    %v241 = vunpack.c.l.b16 %v202
    %v242 = vunpack.c.l.b16 %v203
    %v243 = vunpack.c.l.b16 %v204
    %v244 = vunpack.c.l.b16 %v205
    %v245 = vunpack.c.l.b16 %v206
    %v246 = vunpack.c.l.b16 %v207
    %v247 = vunpack.c.l.b16 %v208
    %v248 = vunpack.c.l.b16 %v209
    %v249 = vunpack.c.l.b16 %v210
    %v250 = vunpack.c.l.b16 %v211
    %v251 = vunpack.c.l.b16 %v212
    %v252 = vpack.c.b16 %v237, %v236
    %v253 = vpack.c.b16 %v239, %v238
    %v254 = vpack.c.b16 %v241, %v240
    %v255 = vpack.c.b16 %v243, %v242
    %v256 = vpack.c.b16 %v245, %v244
    %v257 = vpack.c.b16 %v247, %v246
    %v258 = vpack.c.b16 %v249, %v248
    %v259 = vpack.c.b16 %v251, %v250
    %268 = vmatprep.subr.bf16.mxu0 0
    %269 = vmatpush1.bf16.msra.mxu0 %v252
    %270 = vmatprep.subr.bf16.mxu0 0
    %271 = vmatpush1.bf16.msra.mxu0 %v253
    %272 = vmatprep.subr.bf16.mxu0 0
    %273 = vmatpush1.bf16.msra.mxu0 %v254
    %274 = vmatprep.subr.bf16.mxu0 0
    %275 = vmatpush1.bf16.msra.mxu0 %v255
    %276 = vmatprep.subr.bf16.mxu0 0
    %277 = vmatpush1.bf16.msra.mxu0 %v256
    %278 = vmatprep.subr.bf16.mxu0 0
    %279 = vmatpush1.bf16.msra.mxu0 %v257
    %280 = vmatprep.subr.bf16.mxu0 0
    %281 = vmatpush1.bf16.msra.mxu0 %v258
    %282 = vmatprep.subr.bf16.mxu0 0
    %283 = vmatpush1.bf16.msra.mxu0 %v259
    %284 = vmatprep.subr.bf16.mxu0 0
    %285 = vmatpush1.bf16.msra.mxu0 0
    %286 = vmatprep.subr.bf16.mxu0 0
    %287 = vmatpush1.bf16.msra.mxu0 0
    %288 = vmatprep.subr.bf16.mxu0 0
    %289 = vmatpush1.bf16.msra.mxu0 0
    %290 = vmatprep.subr.bf16.mxu0 0
    %291 = vmatpush1.bf16.msra.mxu0 0
    %292 = vmatprep.subr.bf16.mxu0 0
    %293 = vmatpush1.bf16.msra.mxu0 0
    %294 = vmatprep.subr.bf16.mxu0 0
    %295 = vmatpush1.bf16.msra.mxu0 0
    %296 = vmatprep.subr.bf16.mxu0 0
    %297 = vmatpush1.bf16.msra.mxu0 0
    %298 = vmatprep.subr.bf16.mxu0 0
    %299 = vmatpush1.bf16.msra.mxu0 0
    %300 = vmatprep.mubr.bf16.mxu0 0
    %301 = vmatmul.mubr.bf16.gmra.mrb[0].mxu0 %v196
    %v302 = vpop.f32.mrb[0].mxu0
    %v303 = vadd.f32 %v218, %v302
    %v304 = vpop.f32.mrb[0].mxu0
    %v305 = vpop.f32.mrb[0].mxu0
    %v306 = vadd.f32 %v218, %v305
    %v307 = vpop.f32.mrb[0].mxu0
    %308 = vdwg.mxu0
    %v309 = vmax.f32 %v303, 0.0
    %v310 = vmax.f32 %v306, 0.0
    %v311 = vld [vmem:[%s7] sm:$0xf]
    %v312 = vpack.c.bf16 %v310, %v309
    %313 = vmatprep.subr.bf16.mxu0 0
    %314 = vmatpush1.bf16.xpose.msra.mxu0 %v312
    %315 = vmatprep.subr.bf16.mxu0 0
    %316 = vmatpush1.bf16.xpose.msra.mxu0 0
    %317 = vmatprep.subr.bf16.mxu0 0
    %318 = vmatpush1.bf16.xpose.msra.mxu0 0
    %319 = vmatprep.subr.bf16.mxu0 0
    %320 = vmatpush1.bf16.xpose.msra.mxu0 0
    %321 = vmatprep.subr.bf16.mxu0 0
    %322 = vmatpush1.bf16.xpose.msra.mxu0 0
    %323 = vmatprep.subr.bf16.mxu0 0
    %324 = vmatpush1.bf16.xpose.msra.mxu0 0
    %325 = vmatprep.subr.bf16.mxu0 0
    %326 = vmatpush1.bf16.xpose.msra.mxu0 0
    %327 = vmatprep.subr.bf16.mxu0 0
    %328 = vmatpush1.bf16.xpose.msra.mxu0 0
    %329 = vmatprep.subr.bf16.mxu0 0
    %330 = vmatpush1.bf16.xpose.msra.mxu0 0
    %331 = vmatprep.subr.bf16.mxu0 0
    %332 = vmatpush1.bf16.xpose.msra.mxu0 0
    %333 = vmatprep.subr.bf16.mxu0 0
    %334 = vmatpush1.bf16.xpose.msra.mxu0 0
    %335 = vmatprep.subr.bf16.mxu0 0
    %336 = vmatpush1.bf16.xpose.msra.mxu0 0
    %337 = vmatprep.subr.bf16.mxu0 0
    %338 = vmatpush1.bf16.xpose.msra.mxu0 0
    %339 = vmatprep.subr.bf16.mxu0 0
    %340 = vmatpush1.bf16.xpose.msra.mxu0 0
    %341 = vmatprep.subr.bf16.mxu0 0
    %342 = vmatpush1.bf16.xpose.msra.mxu0 0
    %343 = vmatprep.subr.bf16.mxu0 0
    %344 = vmatpush1.bf16.xpose.msra.mxu0 0
    %345 = vmatprep.mubr.bf16.mxu0 0
    %346 = vmatmul.mubr.bf16.gmra.mrb[0].mxu0 %v311
    %v347 = vpop.f32.mrb[0].mxu0
    %v348 = vadd.f32 0.0, %v347
    %v349 = vpop.f32.mrb[0].mxu0
    %v350 = vpop.f32.mrb[0].mxu0
    %v351 = vpop.f32.mrb[0].mxu0
    %352 = vdwg.mxu0
    %v353 = vld [vmem:[#allocation2] sm:$0x1]
    %355 = vset.pattern.permute.xlu0 0
    %356 = vperm.xlu0 %355, %v353
    %v357 = vpop.permute.xlu0 %356
    %v359 = vlaneseq
    %v360 = vshrl.u32 %v359, 7
    %v361 = vsub.s32 0, %v360
    %v362 = vrot.slane %v357, %v361
    %v363 = vadd.f32 %v348, %v362
    %vm364 = vcmask 122880
    %365 = vst.msk [vmem:[%s9] sm:$0x1] %vm364, %v363
    // Predicated region
    $region50: #{critic_forward.1} parent=1 // pred_check
      _
    $region51: #{critic_forward.1} parent=1 // pred_check_branch
      %367 = sbr.rel (0) target = $region53
    $region52: #{critic_forward.1} parent=1 // pred_region
      _
    $region53: #{critic_forward.1} parent=1 // pred_fallthru
      _
    // Predicated region
    $region54: #{critic_forward.1} parent=1 // pred_check
      _
    $region55: #{critic_forward.1} parent=1 // pred_check_branch
      %369 = sbr.rel (0) target = $region57
    $region56: #{critic_forward.1} parent=1 // pred_region
      _
    $region57: #{critic_forward.1} parent=1 // pred_fallthru
      _
    %370 = vsyncpa [#allocation4], 1
    %371 = vsyncpa [#allocation6], 1

</llo_original>
